<compile_context>
chip_gen: v6e
topology: v6e:2x2x1
jax: 0.10.0
libtpu: 0.0.40
codegen_flags: <defaults>
</compile_context>

<pallas_src>
import functools

import jax
import jax.numpy as jnp
from jax.experimental import pallas as pl
from jax.experimental.pallas import tpu as pltpu

EPS = 1e-3                                   # CharbonnierLoss eps
GAUSS_K = (0.05, 0.25, 0.4, 0.25, 0.05)      # EdgeLoss 1-D gaussian taps


def gauss_conv_matrix(n):
    """(n, n) matrix G such that G @ v == 5-tap gaussian conv of v with replicate pad."""
    k = jnp.array(GAUSS_K, jnp.float32)
    cols = jnp.arange(n)[:, None] + jnp.arange(-2, 3)[None, :]     # (n, 5)
    cols = jnp.clip(cols, 0, n - 1)                                # replicate boundary
    G = jnp.zeros((n, n), jnp.float32)
    G = G.at[jnp.arange(n)[:, None], cols].add(k[None, :])
    return G


def _pick_tb(B, H, W, max_rows):
    """Largest divisor of B whose (TB, H, W) working set stays VMEM-friendly."""
    if H % 8 != 0:            # keep the (TB,H,W) <-> (TB*H,W) reshape tile-aligned
        return 1
    budget = 20 * 2**20
    tb = 1
    for d in range(1, B + 1):
        if B % d:
            continue
        est = 4 * (4 * d * H * W      # x, y double-buffered
                   + 2 * d * H * H    # GHB, GH4EB constants
                   + 2 * W * W        # GWT, GWTE constants
                   + 8 * d * H * W)   # in-kernel f32 temporaries
        if d * H <= max_rows and est <= budget:
            tb = d
    return tb


def _loss_kernel(gwt_ref, gwte_ref, ghb_ref, gh4eb_ref, x_ref, y_ref,
                 char_ref, edge_ref):
    x = x_ref[...]                      # (TB, H, W) f32
    y = y_ref[...]
    TB, H, W = x.shape
    eps2 = jnp.float32(EPS * EPS)

    d = x - y

    # --- Charbonnier on the raw images (partial sum; mean taken in wrapper) ---
    char_ref[...] = jnp.sum(jnp.sqrt(d * d + eps2), keepdims=True)

    # --- EdgeLoss: by linearity laplacian(x) - laplacian(y) == laplacian(d) ---
    # conv_gauss(img) == GH @ img @ GWT ; the even-index mask * 4 of the second
    # conv is pre-folded into GH4E / GWTE in the wrapper.
    gwt = gwt_ref[...]                  # (W, W) == G_W^T
    gwte = gwte_ref[...]                # (W, W)   odd rows zeroed
    ghb = ghb_ref[...]                  # (TB, H, H)
    gh4eb = gh4eb_ref[...]              # (TB, H, H) odd cols zeroed, x4

    # conv1: W-direction as one flat lane-dense matmul, H-direction batched.
    t = jnp.dot(d.reshape(TB * H, W), gwt,
                preferred_element_type=jnp.float32).reshape(TB, H, W)
    f1 = jnp.einsum('bhj,bjw->bhw', ghb, t,
                    preferred_element_type=jnp.float32)

    # conv2 on the masked/upscaled pyramid (mask folded into the matrices).
    t2 = jnp.dot(f1.reshape(TB * H, W), gwte,
                 preferred_element_type=jnp.float32).reshape(TB, H, W)
    f2 = jnp.einsum('bhj,bjw->bhw', gh4eb, t2,
                    preferred_element_type=jnp.float32)

    dl = d - f2
    edge_ref[...] = jnp.sum(jnp.sqrt(dl * dl + eps2), keepdims=True)


@functools.partial(jax.jit, static_argnames=("max_rows",))
def mprnet_loss(y_pred, gt, max_rows=512):
    N, C, H, W = y_pred.shape
    B = N * C                    # 3x channel repeat dropped: the mean is unchanged
    xp = y_pred.astype(jnp.float32).reshape(B, H, W)
    xg = gt.astype(jnp.float32).reshape(B, H, W)

    TB = _pick_tb(B, H, W, max_rows)
    G = B // TB

    GH = gauss_conv_matrix(H)            # (H, H)
    GWT = gauss_conv_matrix(W).T         # (W, W) == G_W^T
    even_h = (jnp.arange(H) % 2 == 0).astype(jnp.float32)
    even_w = (jnp.arange(W) % 2 == 0).astype(jnp.float32)
    GH4E = GH * (4.0 * even_h)[None, :]  # fold "new_filter[::2, ::2] = 4 * down"
    GWTE = GWT * even_w[:, None]
    GHB = jnp.broadcast_to(GH, (TB, H, H))
    GH4EB = jnp.broadcast_to(GH4E, (TB, H, H))

    est = 4 * (4 * TB * H * W + 2 * TB * H * H + 2 * W * W + 8 * TB * H * W)
    vmem_limit = int(min(48 * 2**20, max(2 * est, 16 * 2**20)))

    char_p, edge_p = pl.pallas_call(
        _loss_kernel,
        out_shape=(jax.ShapeDtypeStruct((G, 1, 1), jnp.float32),
                   jax.ShapeDtypeStruct((G, 1, 1), jnp.float32)),
        grid_spec=pltpu.PrefetchScalarGridSpec(
            num_scalar_prefetch=0,
            grid=(G,),
            in_specs=[
                pl.BlockSpec((W, W), lambda i: (0, 0)),
                pl.BlockSpec((W, W), lambda i: (0, 0)),
                pl.BlockSpec((TB, H, H), lambda i: (0, 0, 0)),
                pl.BlockSpec((TB, H, H), lambda i: (0, 0, 0)),
                pl.BlockSpec((TB, H, W), lambda i: (i, 0, 0)),
                pl.BlockSpec((TB, H, W), lambda i: (i, 0, 0)),
            ],
            out_specs=[
                pl.BlockSpec((1, 1, 1), lambda i: (i, 0, 0)),
                pl.BlockSpec((1, 1, 1), lambda i: (i, 0, 0)),
            ],
        ),
        compiler_params=pltpu.CompilerParams(
            dimension_semantics=("parallel",),
            vmem_limit_bytes=vmem_limit),
    )(GWT, GWTE, GHB, GH4EB, xp, xg)

    n = B * H * W
    char_loss = jnp.sum(char_p) / n
    edge_loss = jnp.sum(edge_p) / n
    return char_loss + 0.05 * edge_loss


# ---------------- pure-JAX reference (for validation only) ----------------
# Follows the torch module literally, including the 3x channel replication.
def _ref_conv_gauss(imgs):
    k = jnp.array(GAUSS_K, jnp.float32)
    K = jnp.outer(k, k)[None, None]                       # (1,1,5,5)
    p = jnp.pad(imgs, ((0, 0), (2, 2), (2, 2)), mode="edge")
    out = jax.lax.conv_general_dilated(
        p[:, None, :, :], K, (1, 1), "VALID",
        dimension_numbers=("NCHW", "OIHW", "NCHW"))
    return out[:, 0]


def _ref_laplacian(imgs):
    f = _ref_conv_gauss(imgs)
    nf = jnp.zeros_like(f).at[:, ::2, ::2].set(f[:, ::2, ::2] * 4.0)
    return imgs - _ref_conv_gauss(nf)


def _ref_charbonnier(a, b):
    d = a - b
    return jnp.mean(jnp.sqrt(d * d + EPS * EPS))


def mprnet_loss_ref(y_pred, gt):
    N, C, H, W = y_pred.shape
    xp = jnp.tile(y_pred.astype(jnp.float32), (1, 3, 1, 1)).reshape(N * 3 * C, H, W)
    xg = jnp.tile(gt.astype(jnp.float32), (1, 3, 1, 1)).reshape(N * 3 * C, H, W)
    return (_ref_charbonnier(xp, xg)
            + 0.05 * _ref_charbonnier(_ref_laplacian(xp), _ref_laplacian(xg)))


if __name__ == "__main__":
    key = jax.random.PRNGKey(0)
    k1, k2, k3, k4 = jax.random.split(key, 4)

    # Primary small case (the torch module implies C=1 so repeat -> 3 channels).
    N, C, H, W = 2, 1, 16, 16
    y_pred = jax.random.uniform(k1, (N, C, H, W), dtype=jnp.float32)
    gt = jax.random.uniform(k2, (N, C, H, W), dtype=jnp.float32)

    loss = mprnet_loss(y_pred, gt)
    jax.block_until_ready(loss)
    ref = mprnet_loss_ref(y_pred, gt)
    assert jnp.allclose(loss, ref, rtol=5e-5, atol=5e-6), (loss, ref)

    # Exercise the multi-block parallel grid path (TB=4, G=3).
    yp2 = jax.random.uniform(k3, (12, 1, H, W), dtype=jnp.float32)
    gt2 = jax.random.uniform(k4, (12, 1, H, W), dtype=jnp.float32)
    loss2 = mprnet_loss(yp2, gt2, max_rows=64)
    jax.block_until_ready(loss2)
    ref2 = mprnet_loss_ref(yp2, gt2)
    assert jnp.allclose(loss2, ref2, rtol=5e-5, atol=5e-6), (loss2, ref2)

    print("KERNEL_OK")
</pallas_src>

<mosaic_0001>
module attributes {stable_mosaic.version = 11 : i64} {
  func.func private @main(%arg0: i32) attributes {dimension_semantics = [#tpu.dimension_semantics<core_parallel>], iteration_bounds = array<i64: 2>, tpu.core_type = #tpu.core_type<sc_scalar_subcore>, window_params = []} {
    return
  }
}

module attributes {stable_mosaic.version = 11 : i64} {
  func.func private @main(%arg0: i32) attributes {dimension_semantics = [#tpu.dimension_semantics<core_parallel>], iteration_bounds = array<i64: 2>, tpu.core_type = #tpu.core_type<sc_scalar_subcore>, window_params = []} {
    return
  }
}

module attributes {stable_mosaic.version = 11 : i64} {
  func.func @_loss_kernel(%arg0: i32, %arg1: memref<16x16xf32, #tpu.memory_space<vmem>>, %arg2: memref<16x16xf32, #tpu.memory_space<vmem>>, %arg3: memref<2x16x16xf32, #tpu.memory_space<vmem>>, %arg4: memref<2x16x16xf32, #tpu.memory_space<vmem>>, %arg5: memref<2x16x16xf32, #tpu.memory_space<vmem>>, %arg6: memref<2x16x16xf32, #tpu.memory_space<vmem>>, %arg7: memref<1x1x1xf32, #tpu.memory_space<vmem>>, %arg8: memref<1x1x1xf32, #tpu.memory_space<vmem>>) attributes {dimension_semantics = [#tpu.dimension_semantics<parallel>], iteration_bounds = array<i64: 1>, scalar_prefetch = 0 : i64, scratch_operands = 0 : i64, tpu.core_type = #tpu.core_type<tc>, window_params = [{pipeline_mode = #tpu.pipeline_mode<synchronous>, transform_indices = @transform_0, window_bounds = array<i64: 16, 16>}, {pipeline_mode = #tpu.pipeline_mode<synchronous>, transform_indices = @transform_1, window_bounds = array<i64: 16, 16>}, {pipeline_mode = #tpu.pipeline_mode<synchronous>, transform_indices = @transform_2, window_bounds = array<i64: 2, 16, 16>}, {pipeline_mode = #tpu.pipeline_mode<synchronous>, transform_indices = @transform_3, window_bounds = array<i64: 2, 16, 16>}, {transform_indices = @transform_4, window_bounds = array<i64: 2, 16, 16>}, {transform_indices = @transform_5, window_bounds = array<i64: 2, 16, 16>}, {transform_indices = @transform_6, window_bounds = array<i64: 1, 1, 1>}, {transform_indices = @transform_7, window_bounds = array<i64: 1, 1, 1>}]} {
    %c0 = arith.constant 0 : index
    %c0_0 = arith.constant 0 : index
    %c0_1 = arith.constant 0 : index
    %0 = vector.load %arg5[%c0, %c0_0, %c0_1] : memref<2x16x16xf32, #tpu.memory_space<vmem>>, vector<2x16x16xf32>
    %c0_2 = arith.constant 0 : index
    %c0_3 = arith.constant 0 : index
    %c0_4 = arith.constant 0 : index
    %1 = vector.load %arg6[%c0_2, %c0_3, %c0_4] : memref<2x16x16xf32, #tpu.memory_space<vmem>>, vector<2x16x16xf32>
    %2 = arith.subf %0, %1 : vector<2x16x16xf32>
    %3 = arith.mulf %2, %2 : vector<2x16x16xf32>
    %cst = arith.constant 9.99999997E-7 : f32
    %4 = vector.broadcast %cst : f32 to vector<2x16x16xf32>
    %5 = arith.addf %3, %4 : vector<2x16x16xf32>
    %6 = math.sqrt %5 : vector<2x16x16xf32>
    %7 = vector.shape_cast %6 : vector<2x16x16xf32> to vector<1x2x16x16xf32>
    %cst_5 = arith.constant dense<0.000000e+00> : vector<1xf32>
    %8 = vector.multi_reduction <add>, %7, %cst_5 [1, 2, 3] : vector<1x2x16x16xf32> to vector<1xf32>
    %9 = vector.shape_cast %8 : vector<1xf32> to vector<1x1x1x1xf32>
    %10 = vector.extract %9[0, 0, 0, 0] : f32 from vector<1x1x1x1xf32>
    %11 = vector.broadcast %10 : f32 to vector<1x1x1xf32>
    %c0_6 = arith.constant 0 : index
    %c0_7 = arith.constant 0 : index
    %c0_8 = arith.constant 0 : index
    %12 = vector.load %arg7[%c0_6, %c0_7, %c0_8] : memref<1x1x1xf32, #tpu.memory_space<vmem>>, vector<1x1x1xf32>
    tpu.vector_store %arg7[%c0_6, %c0_7, %c0_8], %11 {strides = array<i32>} : memref<1x1x1xf32, #tpu.memory_space<vmem>>, vector<1x1x1xf32>,
    %c0_9 = arith.constant 0 : index
    %c0_10 = arith.constant 0 : index
    %13 = vector.load %arg1[%c0_9, %c0_10] : memref<16x16xf32, #tpu.memory_space<vmem>>, vector<16x16xf32>
    %c0_11 = arith.constant 0 : index
    %c0_12 = arith.constant 0 : index
    %14 = vector.load %arg2[%c0_11, %c0_12] : memref<16x16xf32, #tpu.memory_space<vmem>>, vector<16x16xf32>
    %c0_13 = arith.constant 0 : index
    %c0_14 = arith.constant 0 : index
    %c0_15 = arith.constant 0 : index
    %15 = vector.load %arg3[%c0_13, %c0_14, %c0_15] : memref<2x16x16xf32, #tpu.memory_space<vmem>>, vector<2x16x16xf32>
    %c0_16 = arith.constant 0 : index
    %c0_17 = arith.constant 0 : index
    %c0_18 = arith.constant 0 : index
    %16 = vector.load %arg4[%c0_16, %c0_17, %c0_18] : memref<2x16x16xf32, #tpu.memory_space<vmem>>, vector<2x16x16xf32>
    %17 = vector.shape_cast %2 : vector<2x16x16xf32> to vector<32x16xf32>
    %cst_19 = arith.constant dense<0.000000e+00> : vector<32x16xf32>
    %18 = tpu.matmul %17, %13, %cst_19 {dimension_numbers = #tpu.dot_dimension_numbers<[1], [0], [0], [1], [0, 0, 1, 1], [], []>} : vector<32x16xf32>, vector<16x16xf32>, vector<32x16xf32> -> vector<32x16xf32>
    %19 = vector.shape_cast %18 : vector<32x16xf32> to vector<2x16x16xf32>
    "tpu.trace_start"() <{level = 10 : i32, message = "bhj,bjw->bhw"}> : () -> ()
    %cst_20 = arith.constant dense<0.000000e+00> : vector<2x16x16xf32>
    %20 = tpu.matmul %15, %19, %cst_20 {dimension_numbers = #tpu.dot_dimension_numbers<[2], [1], [1], [2], [0, 0, 0, 1, 1, 2], [0], [0]>} : vector<2x16x16xf32>, vector<2x16x16xf32>, vector<2x16x16xf32> -> vector<2x16x16xf32>
    "tpu.trace_stop"() : () -> ()
    %21 = vector.shape_cast %20 : vector<2x16x16xf32> to vector<32x16xf32>
    %cst_21 = arith.constant dense<0.000000e+00> : vector<32x16xf32>
    %22 = tpu.matmul %21, %14, %cst_21 {dimension_numbers = #tpu.dot_dimension_numbers<[1], [0], [0], [1], [0, 0, 1, 1], [], []>} : vector<32x16xf32>, vector<16x16xf32>, vector<32x16xf32> -> vector<32x16xf32>
    %23 = vector.shape_cast %22 : vector<32x16xf32> to vector<2x16x16xf32>
    "tpu.trace_start"() <{level = 10 : i32, message = "bhj,bjw->bhw"}> : () -> ()
    %cst_22 = arith.constant dense<0.000000e+00> : vector<2x16x16xf32>
    %24 = tpu.matmul %16, %23, %cst_22 {dimension_numbers = #tpu.dot_dimension_numbers<[2], [1], [1], [2], [0, 0, 0, 1, 1, 2], [0], [0]>} : vector<2x16x16xf32>, vector<2x16x16xf32>, vector<2x16x16xf32> -> vector<2x16x16xf32>
    "tpu.trace_stop"() : () -> ()
    %25 = arith.subf %2, %24 : vector<2x16x16xf32>
    %26 = arith.mulf %25, %25 : vector<2x16x16xf32>
    %cst_23 = arith.constant 9.99999997E-7 : f32
    %27 = vector.broadcast %cst_23 : f32 to vector<2x16x16xf32>
    %28 = arith.addf %26, %27 : vector<2x16x16xf32>
    %29 = math.sqrt %28 : vector<2x16x16xf32>
    %30 = vector.shape_cast %29 : vector<2x16x16xf32> to vector<1x2x16x16xf32>
    %cst_24 = arith.constant dense<0.000000e+00> : vector<1xf32>
    %31 = vector.multi_reduction <add>, %30, %cst_24 [1, 2, 3] : vector<1x2x16x16xf32> to vector<1xf32>
    %32 = vector.shape_cast %31 : vector<1xf32> to vector<1x1x1x1xf32>
    %33 = vector.extract %32[0, 0, 0, 0] : f32 from vector<1x1x1x1xf32>
    %34 = vector.broadcast %33 : f32 to vector<1x1x1xf32>
    %c0_25 = arith.constant 0 : index
    %c0_26 = arith.constant 0 : index
    %c0_27 = arith.constant 0 : index
    %35 = vector.load %arg8[%c0_25, %c0_26, %c0_27] : memref<1x1x1xf32, #tpu.memory_space<vmem>>, vector<1x1x1xf32>
    tpu.vector_store %arg8[%c0_25, %c0_26, %c0_27], %34 {strides = array<i32>} : memref<1x1x1xf32, #tpu.memory_space<vmem>>, vector<1x1x1xf32>,
    return
  }
  func.func @transform_0(%arg0: i32) -> (i32, i32) {
    %c0_i32 = arith.constant 0 : i32
    %c0_i32_0 = arith.constant 0 : i32
    %c0_i32_1 = arith.constant 0 : i32
    return %c0_i32, %c0_i32_0 : i32, i32
  }
  func.func @transform_1(%arg0: i32) -> (i32, i32) {
    %c0_i32 = arith.constant 0 : i32
    %c0_i32_0 = arith.constant 0 : i32
    %c0_i32_1 = arith.constant 0 : i32
    return %c0_i32, %c0_i32_0 : i32, i32
  }
  func.func @transform_2(%arg0: i32) -> (i32, i32, i32) {
    %c0_i32 = arith.constant 0 : i32
    %c0_i32_0 = arith.constant 0 : i32
    %c0_i32_1 = arith.constant 0 : i32
    %c0_i32_2 = arith.constant 0 : i32
    return %c0_i32, %c0_i32_0, %c0_i32_1 : i32, i32, i32
  }
  func.func @transform_3(%arg0: i32) -> (i32, i32, i32) {
    %c0_i32 = arith.constant 0 : i32
    %c0_i32_0 = arith.constant 0 : i32
    %c0_i32_1 = arith.constant 0 : i32
    %c0_i32_2 = arith.constant 0 : i32
    return %c0_i32, %c0_i32_0, %c0_i32_1 : i32, i32, i32
  }
  func.func @transform_4(%arg0: i32) -> (i32, i32, i32) {
    %c0_i32 = arith.constant 0 : i32
    %c0_i32_0 = arith.constant 0 : i32
    %c0_i32_1 = arith.constant 0 : i32
    return %arg0, %c0_i32, %c0_i32_0 : i32, i32, i32
  }
  func.func @transform_5(%arg0: i32) -> (i32, i32, i32) {
    %c0_i32 = arith.constant 0 : i32
    %c0_i32_0 = arith.constant 0 : i32
    %c0_i32_1 = arith.constant 0 : i32
    return %arg0, %c0_i32, %c0_i32_0 : i32, i32, i32
  }
  func.func @transform_6(%arg0: i32) -> (i32, i32, i32) {
    %c0_i32 = arith.constant 0 : i32
    %c0_i32_0 = arith.constant 0 : i32
    %c0_i32_1 = arith.constant 0 : i32
    return %arg0, %c0_i32, %c0_i32_0 : i32, i32, i32
  }
  func.func @transform_7(%arg0: i32) -> (i32, i32, i32) {
    %c0_i32 = arith.constant 0 : i32
    %c0_i32_0 = arith.constant 0 : i32
    %c0_i32_1 = arith.constant 0 : i32
    return %arg0, %c0_i32, %c0_i32_0 : i32, i32, i32
  }
}

</mosaic_0001>

<llo_original>
// kernel: mprnet_loss.1
$region0: #{mprnet_loss.1}
  #allocation0 [shape = 'u32[]', space=smem, size = 0x4, offset = 0x4, fixed_abs, tag = 'smem constant byte address 0x4 - core index']
  #allocation1 [shape = 'u32[144,128]{1,0:T(1,128)}', space=vmem, size = 0x12000, scoped, tag = 'internal scratch']
  %s0 = inlined_call_operand.vmem [shape: f32[16,16], index: 0, kind: input, shape index: {}]
  %s1 = inlined_call_operand.vmem [shape: f32[16,16], index: 1, kind: input, shape index: {}]
  %s2 = inlined_call_operand.vmem [shape: f32[2,16,16], index: 2, kind: input, shape index: {}]
  %s3 = inlined_call_operand.vmem [shape: f32[2,16,16], index: 3, kind: input, shape index: {}]
  %s4 = inlined_call_operand.vmem [shape: f32[2,16,16], index: 4, kind: input, shape index: {}]
  %s5 = inlined_call_operand.vmem [shape: f32[2,16,16], index: 5, kind: input, shape index: {}]
  %s6 = inlined_call_operand.hbm [shape: f32[1,1,1], index: 6, kind: output, shape index: {0}]
  %s7 = inlined_call_operand.hbm [shape: f32[1,1,1], index: 7, kind: output, shape index: {1}]
  %8 = xla_tuple %s6, %s7
  %s9 = sld [smem:[#allocation0]]
  $region42: #{mprnet_loss.1} parent=0
    _
  %s11 = ssub.s32 1, %s9
  %s12 = scalar_select 0, %s11, %s9
  $region1: #{mprnet_loss.1} parent=0
    #allocation2 [shape = 'u8[512]{0}', space=vmem, size = 0x400, scoped, tag = 'output window, operand 0, single buffered']
    #allocation3 [shape = 's32[1]{0}', space=sflag, size = 0x4, scoped, tag = 'scoped memory for mprnet_loss.1']
    #allocation4 [shape = 'u8[512]{0}', space=vmem, size = 0x400, scoped, tag = 'output window, operand 1, single buffered']
    #allocation5 [shape = 's32[1]{0}', space=sflag, size = 0x4, scoped, tag = 'scoped memory for mprnet_loss.1']
    %13 = vsyncpa [#allocation3], 0
    %14 = vsyncpa [#allocation5], 0
    // Predicated region
    $region2: #{mprnet_loss.1} parent=1 // pred_check
      _
    $region3: #{mprnet_loss.1} parent=1 // pred_check_branch
      %16 = sbr.rel (0) target = $region5
    $region4: #{mprnet_loss.1} parent=1 // pred_region
      _
    $region5: #{mprnet_loss.1} parent=1 // pred_fallthru
      _
    // Predicated region
    $region6: #{mprnet_loss.1} parent=1 // pred_check
      _
    $region7: #{mprnet_loss.1} parent=1 // pred_check_branch
      %18 = sbr.rel (0) target = $region9
    $region8: #{mprnet_loss.1} parent=1 // pred_region
      _
    $region9: #{mprnet_loss.1} parent=1 // pred_fallthru
      _
    // Predicated region
    $region10: #{mprnet_loss.1} parent=1 // pred_check
      _
    $region11: #{mprnet_loss.1} parent=1 // pred_check_branch
      %20 = sbr.rel (0) target = $region13
    $region12: #{mprnet_loss.1} parent=1 // pred_region
      _
    $region13: #{mprnet_loss.1} parent=1 // pred_fallthru
      _
    // Predicated region
    $region14: #{mprnet_loss.1} parent=1 // pred_check
      _
    $region15: #{mprnet_loss.1} parent=1 // pred_check_branch
      %22 = sbr.rel (0) target = $region17
    $region16: #{mprnet_loss.1} parent=1 // pred_region
      _
    $region17: #{mprnet_loss.1} parent=1 // pred_fallthru
      _
    // Predicated region
    $region18: #{mprnet_loss.1} parent=1 // pred_check
      _
    $region19: #{mprnet_loss.1} parent=1 // pred_check_branch
      %24 = sbr.rel (0) target = $region21
    $region20: #{mprnet_loss.1} parent=1 // pred_region
      _
    $region21: #{mprnet_loss.1} parent=1 // pred_fallthru
      _
    // Predicated region
    $region22: #{mprnet_loss.1} parent=1 // pred_check
      _
    $region23: #{mprnet_loss.1} parent=1 // pred_check_branch
      %26 = sbr.rel (0) target = $region25
    $region24: #{mprnet_loss.1} parent=1 // pred_region
      _
    $region25: #{mprnet_loss.1} parent=1 // pred_fallthru
      _
    %v27 = vld [vmem:[%s4] sm:$0xff]
    %v28 = vld [vmem:[%s4 + $0x8] sm:$0xff]
    %v29 = vld [vmem:[%s4 + $0x10] sm:$0xff]
    %v30 = vld [vmem:[%s4 + $0x18] sm:$0xff]
    %v31 = vld [vmem:[%s5] sm:$0xff]
    %v32 = vld [vmem:[%s5 + $0x8] sm:$0xff]
    %v33 = vld [vmem:[%s5 + $0x10] sm:$0xff]
    %v34 = vld [vmem:[%s5 + $0x18] sm:$0xff]
    %v35 = vsub.f32 %v27, %v31
    %v36 = vsub.f32 %v28, %v32
    %v37 = vsub.f32 %v29, %v33
    %v38 = vsub.f32 %v30, %v34
    %v39 = vmul.f32 %v35, %v35
    %v40 = vmul.f32 %v36, %v36
    %v41 = vmul.f32 %v37, %v37
    %v42 = vmul.f32 %v38, %v38
    %v43 = vadd.f32 %v39, 1e-06
    %v44 = vadd.f32 %v40, 1e-06
    %v45 = vadd.f32 %v41, 1e-06
    %v46 = vadd.f32 %v42, 1e-06
    %v47 = vrsqrt.pop %v43
    %v48 = vmul.f32 %v43, %v47
    %vm49 = vcmp.eq.f32.partialorder %v43, inf
    %v50 = vsel %vm49, %v43, %v48
    %vm51 = vcmp.eq.f32.partialorder %v43, 0.0
    %v52 = vand.u32 %v43, 2147483648
    %v53 = vsel %vm51, %v52, %v50
    %v54 = vrsqrt.pop %v44
    %v55 = vmul.f32 %v44, %v54
    %vm56 = vcmp.eq.f32.partialorder %v44, inf
    %v57 = vsel %vm56, %v44, %v55
    %vm58 = vcmp.eq.f32.partialorder %v44, 0.0
    %v59 = vand.u32 %v44, 2147483648
    %v60 = vsel %vm58, %v59, %v57
    %v61 = vrsqrt.pop %v45
    %v62 = vmul.f32 %v45, %v61
    %vm63 = vcmp.eq.f32.partialorder %v45, inf
    %v64 = vsel %vm63, %v45, %v62
    %vm65 = vcmp.eq.f32.partialorder %v45, 0.0
    %v66 = vand.u32 %v45, 2147483648
    %v67 = vsel %vm65, %v66, %v64
    %v68 = vrsqrt.pop %v46
    %v69 = vmul.f32 %v46, %v68
    %vm70 = vcmp.eq.f32.partialorder %v46, inf
    %v71 = vsel %vm70, %v46, %v69
    %vm72 = vcmp.eq.f32.partialorder %v46, 0.0
    %v73 = vand.u32 %v46, 2147483648
    %v74 = vsel %vm72, %v73, %v71
    %vm75 = vcmask 130048
    %v76 = vsel %vm75, %v53, 0.0
    %v77 = vsel %vm75, %v60, 0.0
    %v78 = vadd.f32 %v76, %v77
    %v79 = vsel %vm75, %v67, 0.0
    %v80 = vadd.f32 %v78, %v79
    %v81 = vsel %vm75, %v74, 0.0
    %v82 = vadd.f32 %v80, %v81
    %83 = vadd.xlane.f32.xlu0 %v82
    %v84 = vpop.xlane.xlu0 %83
    %v85 = vrot.slane %v84, 4
    %v86 = vadd.f32 %v84, %v85
    %v87 = vrot.slane %v86, 2
    %v88 = vadd.f32 %v86, %v87
    %v89 = vrot.slane %v88, 1
    %v90 = vadd.f32 %v88, %v89
    %s91 = vtos %v90
    %v92 = vstv %s91
    %vm93 = vcmask 0
    %94 = vst.msk [vmem:[#allocation2] sm:$0x1] %vm93, %v92
    %v95 = vld [vmem:[%s0] sm:$0xff]
    %v96 = vld [vmem:[%s0 + $0x8] sm:$0xff]
    %v97 = vld [vmem:[%s1] sm:$0xff]
    %v98 = vld [vmem:[%s1 + $0x8] sm:$0xff]
    %v99 = vld [vmem:[%s2] sm:$0xff]
    %v100 = vld [vmem:[%s2 + $0x8] sm:$0xff]
    %v101 = vld [vmem:[%s2 + $0x10] sm:$0xff]
    %v102 = vld [vmem:[%s2 + $0x18] sm:$0xff]
    %v103 = vld [vmem:[%s3] sm:$0xff]
    %v104 = vld [vmem:[%s3 + $0x8] sm:$0xff]
    %v105 = vld [vmem:[%s3 + $0x10] sm:$0xff]
    %v106 = vld [vmem:[%s3 + $0x18] sm:$0xff]
    %v108 = vsel %vm75, %v35, 0
    %v111 = vsel %vm75, %v36, 0
    %v114 = vsel %vm75, %v37, 0
    %v117 = vsel %vm75, %v38, 0
    %119 = vmatprep.subr.mxu0 0.0
    %120 = vmatpush1.msra.mxu0 0.0
    %121 = vmatprep.subr.mxu0 0.0
    %122 = vmatpush1.msra.mxu0 0.0
    %123 = vmatprep.subr.mxu0 0.0
    %124 = vmatpush1.msra.mxu0 0.0
    %125 = vmatprep.subr.mxu0 0.0
    %126 = vmatpush1.msra.mxu0 0.0
    %127 = vmatprep.subr.mxu0 0.0
    %128 = vmatpush1.msra.mxu0 0.0
    %129 = vmatprep.subr.mxu0 0.0
    %130 = vmatpush1.msra.mxu0 0.0
    %131 = vmatprep.subr.mxu0 0.0
    %132 = vmatpush1.msra.mxu0 0.0
    %133 = vmatprep.subr.mxu0 0.0
    %134 = vmatpush1.msra.mxu0 0.0
    %135 = vmatprep.subr.mxu0 0.0
    %136 = vmatpush1.msra.mxu0 0.0
    %137 = vmatprep.subr.mxu0 0.0
    %138 = vmatpush1.msra.mxu0 0.0
    %139 = vmatprep.subr.mxu0 0.0
    %140 = vmatpush1.msra.mxu0 0.0
    %141 = vmatprep.subr.mxu0 0.0
    %142 = vmatpush1.msra.mxu0 0.0
    %143 = vmatprep.subr.mxu0 0.0
    %144 = vmatpush1.msra.mxu0 0.0
    %145 = vmatprep.subr.mxu0 0.0
    %146 = vmatpush1.msra.mxu0 0.0
    %147 = vmatprep.subr.mxu0 0.0
    %148 = vmatpush1.msra.mxu0 %v96
    %149 = vmatprep.subr.mxu0 0.0
    %150 = vmatpush1.msra.mxu0 %v95
    %151 = vmatprep.subr.mxu0 0.0
    %152 = vmatpush2.msra.mxu0 0.0
    %153 = vmatprep.subr.mxu0 0.0
    %154 = vmatpush2.msra.mxu0 0.0
    %155 = vmatprep.subr.mxu0 0.0
    %156 = vmatpush2.msra.mxu0 0.0
    %157 = vmatprep.subr.mxu0 0.0
    %158 = vmatpush2.msra.mxu0 0.0
    %159 = vmatprep.subr.mxu0 0.0
    %160 = vmatpush2.msra.mxu0 0.0
    %161 = vmatprep.subr.mxu0 0.0
    %162 = vmatpush2.msra.mxu0 0.0
    %163 = vmatprep.subr.mxu0 0.0
    %164 = vmatpush2.msra.mxu0 0.0
    %165 = vmatprep.subr.mxu0 0.0
    %166 = vmatpush2.msra.mxu0 0.0
    %167 = vmatprep.subr.mxu0 0.0
    %168 = vmatpush2.msra.mxu0 0.0
    %169 = vmatprep.subr.mxu0 0.0
    %170 = vmatpush2.msra.mxu0 0.0
    %171 = vmatprep.subr.mxu0 0.0
    %172 = vmatpush2.msra.mxu0 0.0
    %173 = vmatprep.subr.mxu0 0.0
    %174 = vmatpush2.msra.mxu0 0.0
    %175 = vmatprep.subr.mxu0 0.0
    %176 = vmatpush2.msra.mxu0 0.0
    %177 = vmatprep.subr.mxu0 0.0
    %178 = vmatpush2.msra.mxu0 0.0
    %179 = vmatprep.subr.mxu0 0.0
    %180 = vmatpush2.msra.mxu0 0.0
    %181 = vmatprep.subr.mxu0 0.0
    %182 = vmatpush2.msra.mxu0 0.0
    %183 = vmatprep.mubr.f32.mxu0 0.0
    %184 = vmatmul.mubr.f32.gmra.mxu0 %v108
    %v185 = vpop.f32.mrf.mxu0
    %v186 = vadd.f32 0.0, %v185
    %v187 = vpop.f32.mrf.mxu0
    %188 = vmatprep.mubr.f32.mxu0 0.0
    %189 = vmatmul.mubr.f32.gmra.mxu0 %v111
    %v190 = vpop.f32.mrf.mxu0
    %v191 = vadd.f32 0.0, %v190
    %v192 = vpop.f32.mrf.mxu0
    %193 = vmatprep.mubr.f32.mxu0 0.0
    %194 = vmatmul.mubr.f32.gmra.mxu0 %v114
    %v195 = vpop.f32.mrf.mxu0
    %v196 = vadd.f32 0.0, %v195
    %v197 = vpop.f32.mrf.mxu0
    %198 = vmatprep.mubr.f32.mxu0 0.0
    %199 = vmatmul.mubr.f32.gmra.mxu0 %v117
    %v200 = vpop.f32.mrf.mxu0
    %v201 = vadd.f32 0.0, %v200
    %v202 = vpop.f32.mrf.mxu0
    %203 = vdwg.mxu0
    %v205 = vsel %vm75, %v99, 0
    %v208 = vsel %vm75, %v100, 0
    %210 = vmatprep.subr.mxu0 0.0
    %211 = vmatpush1.msra.mxu0 0.0
    %212 = vmatprep.subr.mxu0 0.0
    %213 = vmatpush1.msra.mxu0 0.0
    %214 = vmatprep.subr.mxu0 0.0
    %215 = vmatpush1.msra.mxu0 0.0
    %216 = vmatprep.subr.mxu0 0.0
    %217 = vmatpush1.msra.mxu0 0.0
    %218 = vmatprep.subr.mxu0 0.0
    %219 = vmatpush1.msra.mxu0 0.0
    %220 = vmatprep.subr.mxu0 0.0
    %221 = vmatpush1.msra.mxu0 0.0
    %222 = vmatprep.subr.mxu0 0.0
    %223 = vmatpush1.msra.mxu0 0.0
    %224 = vmatprep.subr.mxu0 0.0
    %225 = vmatpush1.msra.mxu0 0.0
    %226 = vmatprep.subr.mxu0 0.0
    %227 = vmatpush1.msra.mxu0 0.0
    %228 = vmatprep.subr.mxu0 0.0
    %229 = vmatpush1.msra.mxu0 0.0
    %230 = vmatprep.subr.mxu0 0.0
    %231 = vmatpush1.msra.mxu0 0.0
    %232 = vmatprep.subr.mxu0 0.0
    %233 = vmatpush1.msra.mxu0 0.0
    %234 = vmatprep.subr.mxu0 0.0
    %235 = vmatpush1.msra.mxu0 0.0
    %236 = vmatprep.subr.mxu0 0.0
    %237 = vmatpush1.msra.mxu0 0.0
    %238 = vmatprep.subr.mxu0 0.0
    %239 = vmatpush1.msra.mxu0 %v191
    %240 = vmatprep.subr.mxu0 0.0
    %241 = vmatpush1.msra.mxu0 %v186
    %242 = vmatprep.subr.mxu0 0.0
    %243 = vmatpush2.msra.mxu0 0.0
    %244 = vmatprep.subr.mxu0 0.0
    %245 = vmatpush2.msra.mxu0 0.0
    %246 = vmatprep.subr.mxu0 0.0
    %247 = vmatpush2.msra.mxu0 0.0
    %248 = vmatprep.subr.mxu0 0.0
    %249 = vmatpush2.msra.mxu0 0.0
    %250 = vmatprep.subr.mxu0 0.0
    %251 = vmatpush2.msra.mxu0 0.0
    %252 = vmatprep.subr.mxu0 0.0
    %253 = vmatpush2.msra.mxu0 0.0
    %254 = vmatprep.subr.mxu0 0.0
    %255 = vmatpush2.msra.mxu0 0.0
    %256 = vmatprep.subr.mxu0 0.0
    %257 = vmatpush2.msra.mxu0 0.0
    %258 = vmatprep.subr.mxu0 0.0
    %259 = vmatpush2.msra.mxu0 0.0
    %260 = vmatprep.subr.mxu0 0.0
    %261 = vmatpush2.msra.mxu0 0.0
    %262 = vmatprep.subr.mxu0 0.0
    %263 = vmatpush2.msra.mxu0 0.0
    %264 = vmatprep.subr.mxu0 0.0
    %265 = vmatpush2.msra.mxu0 0.0
    %266 = vmatprep.subr.mxu0 0.0
    %267 = vmatpush2.msra.mxu0 0.0
    %268 = vmatprep.subr.mxu0 0.0
    %269 = vmatpush2.msra.mxu0 0.0
    %270 = vmatprep.subr.mxu0 0.0
    %271 = vmatpush2.msra.mxu0 0.0
    %272 = vmatprep.subr.mxu0 0.0
    %273 = vmatpush2.msra.mxu0 0.0
    %274 = vmatprep.mubr.f32.mxu0 0.0
    %275 = vmatmul.mubr.f32.gmra.mxu0 %v205
    %v276 = vpop.f32.mrf.mxu0
    %v277 = vadd.f32 0.0, %v276
    %v278 = vpop.f32.mrf.mxu0
    %279 = vmatprep.mubr.f32.mxu0 0.0
    %280 = vmatmul.mubr.f32.gmra.mxu0 %v208
    %v281 = vpop.f32.mrf.mxu0
    %v282 = vadd.f32 0.0, %v281
    %v283 = vpop.f32.mrf.mxu0
    %284 = vdwg.mxu0
    %v286 = vsel %vm75, %v101, 0
    %v289 = vsel %vm75, %v102, 0
    %291 = vmatprep.subr.mxu0 0.0
    %292 = vmatpush1.msra.mxu0 0.0
    %293 = vmatprep.subr.mxu0 0.0
    %294 = vmatpush1.msra.mxu0 0.0
    %295 = vmatprep.subr.mxu0 0.0
    %296 = vmatpush1.msra.mxu0 0.0
    %297 = vmatprep.subr.mxu0 0.0
    %298 = vmatpush1.msra.mxu0 0.0
    %299 = vmatprep.subr.mxu0 0.0
    %300 = vmatpush1.msra.mxu0 0.0
    %301 = vmatprep.subr.mxu0 0.0
    %302 = vmatpush1.msra.mxu0 0.0
    %303 = vmatprep.subr.mxu0 0.0
    %304 = vmatpush1.msra.mxu0 0.0
    %305 = vmatprep.subr.mxu0 0.0
    %306 = vmatpush1.msra.mxu0 0.0
    %307 = vmatprep.subr.mxu0 0.0
    %308 = vmatpush1.msra.mxu0 0.0
    %309 = vmatprep.subr.mxu0 0.0
    %310 = vmatpush1.msra.mxu0 0.0
    %311 = vmatprep.subr.mxu0 0.0
    %312 = vmatpush1.msra.mxu0 0.0
    %313 = vmatprep.subr.mxu0 0.0
    %314 = vmatpush1.msra.mxu0 0.0
    %315 = vmatprep.subr.mxu0 0.0
    %316 = vmatpush1.msra.mxu0 0.0
    %317 = vmatprep.subr.mxu0 0.0
    %318 = vmatpush1.msra.mxu0 0.0
    %319 = vmatprep.subr.mxu0 0.0
    %320 = vmatpush1.msra.mxu0 %v201
    %321 = vmatprep.subr.mxu0 0.0
    %322 = vmatpush1.msra.mxu0 %v196
    %323 = vmatprep.subr.mxu0 0.0
    %324 = vmatpush2.msra.mxu0 0.0
    %325 = vmatprep.subr.mxu0 0.0
    %326 = vmatpush2.msra.mxu0 0.0
    %327 = vmatprep.subr.mxu0 0.0
    %328 = vmatpush2.msra.mxu0 0.0
    %329 = vmatprep.subr.mxu0 0.0
    %330 = vmatpush2.msra.mxu0 0.0
    %331 = vmatprep.subr.mxu0 0.0
    %332 = vmatpush2.msra.mxu0 0.0
    %333 = vmatprep.subr.mxu0 0.0
    %334 = vmatpush2.msra.mxu0 0.0
    %335 = vmatprep.subr.mxu0 0.0
    %336 = vmatpush2.msra.mxu0 0.0
    %337 = vmatprep.subr.mxu0 0.0
    %338 = vmatpush2.msra.mxu0 0.0
    %339 = vmatprep.subr.mxu0 0.0
    %340 = vmatpush2.msra.mxu0 0.0
    %341 = vmatprep.subr.mxu0 0.0
    %342 = vmatpush2.msra.mxu0 0.0
    %343 = vmatprep.subr.mxu0 0.0
    %344 = vmatpush2.msra.mxu0 0.0
    %345 = vmatprep.subr.mxu0 0.0
    %346 = vmatpush2.msra.mxu0 0.0
    %347 = vmatprep.subr.mxu0 0.0
    %348 = vmatpush2.msra.mxu0 0.0
    %349 = vmatprep.subr.mxu0 0.0
    %350 = vmatpush2.msra.mxu0 0.0
    %351 = vmatprep.subr.mxu0 0.0
    %352 = vmatpush2.msra.mxu0 0.0
    %353 = vmatprep.subr.mxu0 0.0
    %354 = vmatpush2.msra.mxu0 0.0
    %355 = vmatprep.mubr.f32.mxu0 0.0
    %356 = vmatmul.mubr.f32.gmra.mxu0 %v286
    %v357 = vpop.f32.mrf.mxu0
    %v358 = vadd.f32 0.0, %v357
    %v359 = vpop.f32.mrf.mxu0
    %360 = vmatprep.mubr.f32.mxu0 0.0
    %361 = vmatmul.mubr.f32.gmra.mxu0 %v289
    %v362 = vpop.f32.mrf.mxu0
    %v363 = vadd.f32 0.0, %v362
    %v364 = vpop.f32.mrf.mxu0
    %365 = vdwg.mxu0
    %v367 = vsel %vm75, %v277, 0
    %v370 = vsel %vm75, %v282, 0
    %v373 = vsel %vm75, %v358, 0
    %v376 = vsel %vm75, %v363, 0
    %378 = vmatprep.subr.mxu0 0.0
    %379 = vmatpush1.msra.mxu0 0.0
    %380 = vmatprep.subr.mxu0 0.0
    %381 = vmatpush1.msra.mxu0 0.0
    %382 = vmatprep.subr.mxu0 0.0
    %383 = vmatpush1.msra.mxu0 0.0
    %384 = vmatprep.subr.mxu0 0.0
    %385 = vmatpush1.msra.mxu0 0.0
    %386 = vmatprep.subr.mxu0 0.0
    %387 = vmatpush1.msra.mxu0 0.0
    %388 = vmatprep.subr.mxu0 0.0
    %389 = vmatpush1.msra.mxu0 0.0
    %390 = vmatprep.subr.mxu0 0.0
    %391 = vmatpush1.msra.mxu0 0.0
    %392 = vmatprep.subr.mxu0 0.0
    %393 = vmatpush1.msra.mxu0 0.0
    %394 = vmatprep.subr.mxu0 0.0
    %395 = vmatpush1.msra.mxu0 0.0
    %396 = vmatprep.subr.mxu0 0.0
    %397 = vmatpush1.msra.mxu0 0.0
    %398 = vmatprep.subr.mxu0 0.0
    %399 = vmatpush1.msra.mxu0 0.0
    %400 = vmatprep.subr.mxu0 0.0
    %401 = vmatpush1.msra.mxu0 0.0
    %402 = vmatprep.subr.mxu0 0.0
    %403 = vmatpush1.msra.mxu0 0.0
    %404 = vmatprep.subr.mxu0 0.0
    %405 = vmatpush1.msra.mxu0 0.0
    %406 = vmatprep.subr.mxu0 0.0
    %407 = vmatpush1.msra.mxu0 %v98
    %408 = vmatprep.subr.mxu0 0.0
    %409 = vmatpush1.msra.mxu0 %v97
    %410 = vmatprep.subr.mxu0 0.0
    %411 = vmatpush2.msra.mxu0 0.0
    %412 = vmatprep.subr.mxu0 0.0
    %413 = vmatpush2.msra.mxu0 0.0
    %414 = vmatprep.subr.mxu0 0.0
    %415 = vmatpush2.msra.mxu0 0.0
    %416 = vmatprep.subr.mxu0 0.0
    %417 = vmatpush2.msra.mxu0 0.0
    %418 = vmatprep.subr.mxu0 0.0
    %419 = vmatpush2.msra.mxu0 0.0
    %420 = vmatprep.subr.mxu0 0.0
    %421 = vmatpush2.msra.mxu0 0.0
    %422 = vmatprep.subr.mxu0 0.0
    %423 = vmatpush2.msra.mxu0 0.0
    %424 = vmatprep.subr.mxu0 0.0
    %425 = vmatpush2.msra.mxu0 0.0
    %426 = vmatprep.subr.mxu0 0.0
    %427 = vmatpush2.msra.mxu0 0.0
    %428 = vmatprep.subr.mxu0 0.0
    %429 = vmatpush2.msra.mxu0 0.0
    %430 = vmatprep.subr.mxu0 0.0
    %431 = vmatpush2.msra.mxu0 0.0
    %432 = vmatprep.subr.mxu0 0.0
    %433 = vmatpush2.msra.mxu0 0.0
    %434 = vmatprep.subr.mxu0 0.0
    %435 = vmatpush2.msra.mxu0 0.0
    %436 = vmatprep.subr.mxu0 0.0
    %437 = vmatpush2.msra.mxu0 0.0
    %438 = vmatprep.subr.mxu0 0.0
    %439 = vmatpush2.msra.mxu0 0.0
    %440 = vmatprep.subr.mxu0 0.0
    %441 = vmatpush2.msra.mxu0 0.0
    %442 = vmatprep.mubr.f32.mxu0 0.0
    %443 = vmatmul.mubr.f32.gmra.mxu0 %v367
    %v444 = vpop.f32.mrf.mxu0
    %v445 = vadd.f32 0.0, %v444
    %v446 = vpop.f32.mrf.mxu0
    %447 = vmatprep.mubr.f32.mxu0 0.0
    %448 = vmatmul.mubr.f32.gmra.mxu0 %v370
    %v449 = vpop.f32.mrf.mxu0
    %v450 = vadd.f32 0.0, %v449
    %v451 = vpop.f32.mrf.mxu0
    %452 = vmatprep.mubr.f32.mxu0 0.0
    %453 = vmatmul.mubr.f32.gmra.mxu0 %v373
    %v454 = vpop.f32.mrf.mxu0
    %v455 = vadd.f32 0.0, %v454
    %v456 = vpop.f32.mrf.mxu0
    %457 = vmatprep.mubr.f32.mxu0 0.0
    %458 = vmatmul.mubr.f32.gmra.mxu0 %v376
    %v459 = vpop.f32.mrf.mxu0
    %v460 = vadd.f32 0.0, %v459
    %v461 = vpop.f32.mrf.mxu0
    %462 = vdwg.mxu0
    %v464 = vsel %vm75, %v103, 0
    %v467 = vsel %vm75, %v104, 0
    %469 = vmatprep.subr.mxu0 0.0
    %470 = vmatpush1.msra.mxu0 0.0
    %471 = vmatprep.subr.mxu0 0.0
    %472 = vmatpush1.msra.mxu0 0.0
    %473 = vmatprep.subr.mxu0 0.0
    %474 = vmatpush1.msra.mxu0 0.0
    %475 = vmatprep.subr.mxu0 0.0
    %476 = vmatpush1.msra.mxu0 0.0
    %477 = vmatprep.subr.mxu0 0.0
    %478 = vmatpush1.msra.mxu0 0.0
    %479 = vmatprep.subr.mxu0 0.0
    %480 = vmatpush1.msra.mxu0 0.0
    %481 = vmatprep.subr.mxu0 0.0
    %482 = vmatpush1.msra.mxu0 0.0
    %483 = vmatprep.subr.mxu0 0.0
    %484 = vmatpush1.msra.mxu0 0.0
    %485 = vmatprep.subr.mxu0 0.0
    %486 = vmatpush1.msra.mxu0 0.0
    %487 = vmatprep.subr.mxu0 0.0
    %488 = vmatpush1.msra.mxu0 0.0
    %489 = vmatprep.subr.mxu0 0.0
    %490 = vmatpush1.msra.mxu0 0.0
    %491 = vmatprep.subr.mxu0 0.0
    %492 = vmatpush1.msra.mxu0 0.0
    %493 = vmatprep.subr.mxu0 0.0
    %494 = vmatpush1.msra.mxu0 0.0
    %495 = vmatprep.subr.mxu0 0.0
    %496 = vmatpush1.msra.mxu0 0.0
    %497 = vmatprep.subr.mxu0 0.0
    %498 = vmatpush1.msra.mxu0 %v450
    %499 = vmatprep.subr.mxu0 0.0
    %500 = vmatpush1.msra.mxu0 %v445
    %501 = vmatprep.subr.mxu0 0.0
    %502 = vmatpush2.msra.mxu0 0.0
    %503 = vmatprep.subr.mxu0 0.0
    %504 = vmatpush2.msra.mxu0 0.0
    %505 = vmatprep.subr.mxu0 0.0
    %506 = vmatpush2.msra.mxu0 0.0
    %507 = vmatprep.subr.mxu0 0.0
    %508 = vmatpush2.msra.mxu0 0.0
    %509 = vmatprep.subr.mxu0 0.0
    %510 = vmatpush2.msra.mxu0 0.0
    %511 = vmatprep.subr.mxu0 0.0
    %512 = vmatpush2.msra.mxu0 0.0
    %513 = vmatprep.subr.mxu0 0.0
    %514 = vmatpush2.msra.mxu0 0.0
    %515 = vmatprep.subr.mxu0 0.0
    %516 = vmatpush2.msra.mxu0 0.0
    %517 = vmatprep.subr.mxu0 0.0
    %518 = vmatpush2.msra.mxu0 0.0
    %519 = vmatprep.subr.mxu0 0.0
    %520 = vmatpush2.msra.mxu0 0.0
    %521 = vmatprep.subr.mxu0 0.0
    %522 = vmatpush2.msra.mxu0 0.0
    %523 = vmatprep.subr.mxu0 0.0
    %524 = vmatpush2.msra.mxu0 0.0
    %525 = vmatprep.subr.mxu0 0.0
    %526 = vmatpush2.msra.mxu0 0.0
    %527 = vmatprep.subr.mxu0 0.0
    %528 = vmatpush2.msra.mxu0 0.0
    %529 = vmatprep.subr.mxu0 0.0
    %530 = vmatpush2.msra.mxu0 0.0
    %531 = vmatprep.subr.mxu0 0.0
    %532 = vmatpush2.msra.mxu0 0.0
    %533 = vmatprep.mubr.f32.mxu0 0.0
    %534 = vmatmul.mubr.f32.gmra.mxu0 %v464
    %v535 = vpop.f32.mrf.mxu0
    %v536 = vadd.f32 0.0, %v535
    %v537 = vpop.f32.mrf.mxu0
    %538 = vmatprep.mubr.f32.mxu0 0.0
    %539 = vmatmul.mubr.f32.gmra.mxu0 %v467
    %v540 = vpop.f32.mrf.mxu0
    %v541 = vadd.f32 0.0, %v540
    %v542 = vpop.f32.mrf.mxu0
    %543 = vdwg.mxu0
    %v545 = vsel %vm75, %v105, 0
    %v548 = vsel %vm75, %v106, 0
    %550 = vmatprep.subr.mxu0 0.0
    %551 = vmatpush1.msra.mxu0 0.0
    %552 = vmatprep.subr.mxu0 0.0
    %553 = vmatpush1.msra.mxu0 0.0
    %554 = vmatprep.subr.mxu0 0.0
    %555 = vmatpush1.msra.mxu0 0.0
    %556 = vmatprep.subr.mxu0 0.0
    %557 = vmatpush1.msra.mxu0 0.0
    %558 = vmatprep.subr.mxu0 0.0
    %559 = vmatpush1.msra.mxu0 0.0
    %560 = vmatprep.subr.mxu0 0.0
    %561 = vmatpush1.msra.mxu0 0.0
    %562 = vmatprep.subr.mxu0 0.0
    %563 = vmatpush1.msra.mxu0 0.0
    %564 = vmatprep.subr.mxu0 0.0
    %565 = vmatpush1.msra.mxu0 0.0
    %566 = vmatprep.subr.mxu0 0.0
    %567 = vmatpush1.msra.mxu0 0.0
    %568 = vmatprep.subr.mxu0 0.0
    %569 = vmatpush1.msra.mxu0 0.0
    %570 = vmatprep.subr.mxu0 0.0
    %571 = vmatpush1.msra.mxu0 0.0
    %572 = vmatprep.subr.mxu0 0.0
    %573 = vmatpush1.msra.mxu0 0.0
    %574 = vmatprep.subr.mxu0 0.0
    %575 = vmatpush1.msra.mxu0 0.0
    %576 = vmatprep.subr.mxu0 0.0
    %577 = vmatpush1.msra.mxu0 0.0
    %578 = vmatprep.subr.mxu0 0.0
    %579 = vmatpush1.msra.mxu0 %v460
    %580 = vmatprep.subr.mxu0 0.0
    %581 = vmatpush1.msra.mxu0 %v455
    %582 = vmatprep.subr.mxu0 0.0
    %583 = vmatpush2.msra.mxu0 0.0
    %584 = vmatprep.subr.mxu0 0.0
    %585 = vmatpush2.msra.mxu0 0.0
    %586 = vmatprep.subr.mxu0 0.0
    %587 = vmatpush2.msra.mxu0 0.0
    %588 = vmatprep.subr.mxu0 0.0
    %589 = vmatpush2.msra.mxu0 0.0
    %590 = vmatprep.subr.mxu0 0.0
    %591 = vmatpush2.msra.mxu0 0.0
    %592 = vmatprep.subr.mxu0 0.0
    %593 = vmatpush2.msra.mxu0 0.0
    %594 = vmatprep.subr.mxu0 0.0
    %595 = vmatpush2.msra.mxu0 0.0
    %596 = vmatprep.subr.mxu0 0.0
    %597 = vmatpush2.msra.mxu0 0.0
    %598 = vmatprep.subr.mxu0 0.0
    %599 = vmatpush2.msra.mxu0 0.0
    %600 = vmatprep.subr.mxu0 0.0
    %601 = vmatpush2.msra.mxu0 0.0
    %602 = vmatprep.subr.mxu0 0.0
    %603 = vmatpush2.msra.mxu0 0.0
    %604 = vmatprep.subr.mxu0 0.0
    %605 = vmatpush2.msra.mxu0 0.0
    %606 = vmatprep.subr.mxu0 0.0
    %607 = vmatpush2.msra.mxu0 0.0
    %608 = vmatprep.subr.mxu0 0.0
    %609 = vmatpush2.msra.mxu0 0.0
    %610 = vmatprep.subr.mxu0 0.0
    %611 = vmatpush2.msra.mxu0 0.0
    %612 = vmatprep.subr.mxu0 0.0
    %613 = vmatpush2.msra.mxu0 0.0
    %614 = vmatprep.mubr.f32.mxu0 0.0
    %615 = vmatmul.mubr.f32.gmra.mxu0 %v545
    %v616 = vpop.f32.mrf.mxu0
    %v617 = vadd.f32 0.0, %v616
    %v618 = vpop.f32.mrf.mxu0
    %619 = vmatprep.mubr.f32.mxu0 0.0
    %620 = vmatmul.mubr.f32.gmra.mxu0 %v548
    %v621 = vpop.f32.mrf.mxu0
    %v622 = vadd.f32 0.0, %v621
    %v623 = vpop.f32.mrf.mxu0
    %624 = vdwg.mxu0
    %v625 = vsub.f32 %v35, %v536
    %v626 = vsub.f32 %v36, %v541
    %v627 = vsub.f32 %v37, %v617
    %v628 = vsub.f32 %v38, %v622
    %v629 = vmul.f32 %v625, %v625
    %v630 = vmul.f32 %v626, %v626
    %v631 = vmul.f32 %v627, %v627
    %v632 = vmul.f32 %v628, %v628
    %v633 = vadd.f32 %v629, 1e-06
    %v634 = vadd.f32 %v630, 1e-06
    %v635 = vadd.f32 %v631, 1e-06
    %v636 = vadd.f32 %v632, 1e-06
    %v637 = vrsqrt.pop %v633
    %v638 = vmul.f32 %v633, %v637
    %vm639 = vcmp.eq.f32.partialorder %v633, inf
    %v640 = vsel %vm639, %v633, %v638
    %vm641 = vcmp.eq.f32.partialorder %v633, 0.0
    %v642 = vand.u32 %v633, 2147483648
    %v643 = vsel %vm641, %v642, %v640
    %v644 = vrsqrt.pop %v634
    %v645 = vmul.f32 %v634, %v644
    %vm646 = vcmp.eq.f32.partialorder %v634, inf
    %v647 = vsel %vm646, %v634, %v645
    %vm648 = vcmp.eq.f32.partialorder %v634, 0.0
    %v649 = vand.u32 %v634, 2147483648
    %v650 = vsel %vm648, %v649, %v647
    %v651 = vrsqrt.pop %v635
    %v652 = vmul.f32 %v635, %v651
    %vm653 = vcmp.eq.f32.partialorder %v635, inf
    %v654 = vsel %vm653, %v635, %v652
    %vm655 = vcmp.eq.f32.partialorder %v635, 0.0
    %v656 = vand.u32 %v635, 2147483648
    %v657 = vsel %vm655, %v656, %v654
    %v658 = vrsqrt.pop %v636
    %v659 = vmul.f32 %v636, %v658
    %vm660 = vcmp.eq.f32.partialorder %v636, inf
    %v661 = vsel %vm660, %v636, %v659
    %vm662 = vcmp.eq.f32.partialorder %v636, 0.0
    %v663 = vand.u32 %v636, 2147483648
    %v664 = vsel %vm662, %v663, %v661
    %v665 = vsel %vm75, %v643, 0.0
    %v666 = vsel %vm75, %v650, 0.0
    %v667 = vadd.f32 %v665, %v666
    %v668 = vsel %vm75, %v657, 0.0
    %v669 = vadd.f32 %v667, %v668
    %v670 = vsel %vm75, %v664, 0.0
    %v671 = vadd.f32 %v669, %v670
    %672 = vadd.xlane.f32.xlu0 %v671
    %v673 = vpop.xlane.xlu0 %672
    %v674 = vrot.slane %v673, 4
    %v675 = vadd.f32 %v673, %v674
    %v676 = vrot.slane %v675, 2
    %v677 = vadd.f32 %v675, %v676
    %v678 = vrot.slane %v677, 1
    %v679 = vadd.f32 %v677, %v678
    %s680 = vtos %v679
    %v681 = vstv %s680
    %682 = vst.msk [vmem:[#allocation4] sm:$0x1] %vm93, %v681
    // Predicated region
    $region26: #{mprnet_loss.1} parent=1 // pred_check
      _
    $region27: #{mprnet_loss.1} parent=1 // pred_check_branch
      %684 = sbr.rel (0) target = $region29
    $region28: #{mprnet_loss.1} parent=1 // pred_region
      %s686 = ssub.s32 16, 16
      %687 = vsyncadd [#allocation3], %s686
      %s689 = sshll.u32 [#allocation2], 4
      %s690 = int_to_ptr.vmem [resolvable:$true] %s689
      %692 = dma.vmem_to_hbm [thread:$0]  %s690, 16, %s6, [#allocation3]
    $region29: #{mprnet_loss.1} parent=1 // pred_fallthru
      _
    // Predicated region
    $region30: #{mprnet_loss.1} parent=1 // pred_check
      _
    $region31: #{mprnet_loss.1} parent=1 // pred_check_branch
      %694 = sbr.rel (0) target = $region33
    $region32: #{mprnet_loss.1} parent=1 // pred_region
      %s696 = ssub.s32 16, 16
      %697 = vsyncadd [#allocation5], %s696
      %s699 = sshll.u32 [#allocation4], 4
      %s700 = int_to_ptr.vmem [resolvable:$true] %s699
      %702 = dma.vmem_to_hbm [thread:$0]  %s700, 16, %s7, [#allocation5]
    $region33: #{mprnet_loss.1} parent=1 // pred_fallthru
      _
    // Predicated region
    $region34: #{mprnet_loss.1} parent=1 // pred_check
      _
    $region35: #{mprnet_loss.1} parent=1 // pred_check_branch
      %704 = sbr.rel (0) target = $region37
    $region36: #{mprnet_loss.1} parent=1 // pred_region
      %705 = dma.done [#allocation3], 16
    $region37: #{mprnet_loss.1} parent=1 // pred_fallthru
      _
    // Predicated region
    $region38: #{mprnet_loss.1} parent=1 // pred_check
      _
    $region39: #{mprnet_loss.1} parent=1 // pred_check_branch
      %707 = sbr.rel (0) target = $region41
    $region40: #{mprnet_loss.1} parent=1 // pred_region
      %708 = dma.done [#allocation5], 16
    $region41: #{mprnet_loss.1} parent=1 // pred_fallthru
      _
    %709 = vsyncpa [#allocation3], 1
    %710 = vsyncpa [#allocation5], 1

</llo_original>
